<compile_context>
chip_gen: v5e
topology: v5e:2x2
jax: 0.10.0
libtpu: 0.0.40
codegen_flags: <defaults>
</compile_context>

<pallas_src>
import functools

import numpy as np
import jax
import jax.numpy as jnp
from jax.experimental import pallas as pl
from jax.experimental.pallas import tpu as pltpu


_LANE = 128
_RATIO_QUANT = 64                 # ratio quantized to 1/64 steps -> bounded compile set
_VMEM_BUDGET = 24 * 1024 * 1024   # per-step working-set budget (headroom under 32 MiB)
_MAX_TB = 64                      # cap slices per grid step (bounds unroll / compile size)


def _cdiv(a, b):
    return -(-a // b)


def _round_up(a, b):
    return _cdiv(a, b) * b


@functools.lru_cache(maxsize=None)
def _resize_matrix(in_size: int, ratio_q: int) -> np.ndarray:
    """PyTorch-exact bilinear interpolation weight matrix (align_corners=False)."""
    scale = ratio_q / _RATIO_QUANT
    out_size = int(np.floor(in_size * scale))
    i = np.arange(out_size, dtype=np.float64)
    src = np.maximum((i + 0.5) / scale - 0.5, 0.0)       # PyTorch clamps negative src to 0
    idx0 = np.minimum(np.floor(src).astype(np.int64), in_size - 1)
    idx1 = np.minimum(idx0 + 1, in_size - 1)
    lam1 = (src - idx0).astype(np.float32)
    lam0 = (1.0 - lam1).astype(np.float32)
    R = np.zeros((out_size, in_size), dtype=np.float32)
    R[np.arange(out_size), idx0] += lam0
    R[np.arange(out_size), idx1] += lam1
    return R


def _resize_kernel(x_ref, rh_ref, rwt_ref, o_ref):
    # x_ref:   (TB, H, W)        batch of image slices
    # rh_ref:  (Ho, H)           height interpolation weights
    # rwt_ref: (W, Wo_pad)       width interpolation weights (transposed, lane-padded)
    # o_ref:   (TB, Ho, Wo_pad)
    tb = x_ref.shape[0]
    rh = rh_ref[...]
    rwt = rwt_ref[...]
    wdt = rh.dtype
    # tb is a small static count -> fully unrolled; each iteration is two MXU
    # matmuls and one lane-dense store, with per-slice temporaries only.
    for b in range(tb):
        tmp = jnp.dot(x_ref[b], rwt, preferred_element_type=jnp.float32)   # (H, Wo_pad)
        out = jnp.dot(rh, tmp.astype(wdt),
                      preferred_element_type=jnp.float32)                  # (Ho, Wo_pad)
        o_ref[b] = out.astype(o_ref.dtype)


@functools.lru_cache(maxsize=None)
def _build_resize_call(h, w, ho, wo_pad, tb, grid, dtype_name, vmem_limit):
    dtype = jnp.dtype(dtype_name)
    cp_kwargs = dict(dimension_semantics=("parallel",))
    if vmem_limit is not None:
        cp_kwargs["vmem_limit_bytes"] = int(vmem_limit)
    call = pl.pallas_call(
        _resize_kernel,
        out_shape=jax.ShapeDtypeStruct((tb * grid, ho, wo_pad), dtype),
        grid_spec=pltpu.PrefetchScalarGridSpec(
            num_scalar_prefetch=0,
            grid=(grid,),
            in_specs=[
                pl.BlockSpec((tb, h, w), lambda i: (i, 0, 0)),
                pl.BlockSpec((ho, h), lambda i: (0, 0)),
                pl.BlockSpec((w, wo_pad), lambda i: (0, 0)),
            ],
            out_specs=pl.BlockSpec((tb, ho, wo_pad), lambda i: (i, 0, 0)),
        ),
        compiler_params=pltpu.CompilerParams(**cp_kwargs),
    )
    return jax.jit(call)


def _resize_slices(flat_parts, H, W, dtype, ratio_q):
    """Bilinear-resize a list of (b_i, H, W) slice stacks (already in `dtype`)."""
    B = sum(int(p.shape[0]) for p in flat_parts)

    Rh = _resize_matrix(H, ratio_q)                 # (Ho, H)
    Rw = _resize_matrix(W, ratio_q)                 # (Wo, W)
    Ho, Wo = Rh.shape[0], Rw.shape[0]
    Wo_pad = _round_up(max(Wo, _LANE), _LANE)       # lane-dense output stores

    # Weights in bf16 when activations are bf16 (native MXU input), f32 otherwise;
    # accumulation is always f32 in the kernel.
    wdtype = jnp.bfloat16 if dtype == jnp.bfloat16 else jnp.float32
    RwT_pad = np.zeros((W, Wo_pad), dtype=np.float32)
    RwT_pad[:, :Wo] = Rw.T
    Rh_j = jnp.asarray(Rh, dtype=wdtype)
    RwT_j = jnp.asarray(RwT_pad, dtype=wdtype)

    # VMEM budget: double-buffered input + output block per slice, resident
    # weights (conservatively x2), plus one slice worth of f32 temporaries.
    itemsize = jnp.dtype(dtype).itemsize
    witemsize = jnp.dtype(wdtype).itemsize
    per_slice = 2 * (H * W + Ho * Wo_pad) * itemsize
    transient = (H + Ho) * Wo_pad * 4
    weight_bytes = 2 * (Ho * H + W * Wo_pad) * witemsize
    avail = _VMEM_BUDGET - weight_bytes - transient
    tb = max(1, min(B, _MAX_TB, avail // max(per_slice, 1)))
    grid = _cdiv(B, tb)
    if grid < 2 and B >= 2:
        grid = 2                                    # >= 2 steps -> both v7x cores busy
    tb = _cdiv(B, grid)
    grid = _cdiv(B, tb)
    Bpad = tb * grid

    vmem_est = tb * per_slice + weight_bytes + transient + (4 << 20)
    vmem_limit = int(min(vmem_est, 64 << 20)) if vmem_est > (32 << 20) else None
    # TODO(synk): images so large that a single slice exceeds VMEM would need an
    # additional spatial tiling axis; not required for this noise layer's sizes.

    # Fold batch padding into the (single) fusion concatenation -> one input copy.
    parts = list(flat_parts)
    if Bpad != B:
        parts.append(jnp.zeros((Bpad - B, H, W), dtype))
    slab = parts[0] if len(parts) == 1 else jnp.concatenate(parts, axis=0)

    call = _build_resize_call(H, W, Ho, Wo_pad, tb, grid, str(jnp.dtype(dtype)),
                              vmem_limit)
    out = call(slab, Rh_j, RwT_j)                   # (Bpad, Ho, Wo_pad)
    return out[:B, :, :Wo], Ho, Wo


def _reference_resize(x: jax.Array, ratio_q: int) -> jax.Array:
    """Pure-JAX reference using the same separable weight matrices."""
    Rh = jnp.asarray(_resize_matrix(x.shape[-2], ratio_q))
    Rw = jnp.asarray(_resize_matrix(x.shape[-1], ratio_q))
    out = jnp.einsum("oh,nchw,pw->ncop", Rh, x.astype(jnp.float32), Rw)
    return out.astype(x.dtype)


class ResizePallas:
    """Pallas/TPU mirror of the PyTorch Resize noise layer (bilinear)."""

    def __init__(self, resize_ratio_min, resize_ratio_max,
                 interpolation_method="bilinear"):
        assert interpolation_method == "bilinear"
        self.resize_ratio_min = resize_ratio_min
        self.resize_ratio_max = resize_ratio_max
        self.last_ratio = None

    def __call__(self, rng, container, fake_image, secret_image, face_mask):
        # Host-side ratio draw (matches random_float in the PyTorch layer): no
        # device->host sync. Quantized to 1/64 so output shapes -- and therefore
        # compiled kernels -- come from a small, cached set.
        ratio = float(rng.uniform(self.resize_ratio_min, self.resize_ratio_max))
        ratio_q = max(1, int(round(ratio * _RATIO_QUANT)))
        self.last_ratio = ratio_q / _RATIO_QUANT

        tensors = (container, fake_image, secret_image, face_mask)
        H, W = container.shape[-2:]
        cdtype = jnp.result_type(*tensors)

        # Fuse all four resizes into a single pallas_call: flatten each NCHW tensor
        # to (N*C, H, W) slices and stack along the leading axis.
        flat = [jnp.asarray(t).reshape(-1, H, W).astype(cdtype) for t in tensors]
        sizes = [f.shape[0] for f in flat]

        out_slab, Ho, Wo = _resize_slices(flat, H, W, cdtype, ratio_q)

        outs, off = [], 0
        for t, sz in zip(tensors, sizes):
            o = out_slab[off:off + sz].reshape(t.shape[:-2] + (Ho, Wo)).astype(t.dtype)
            outs.append(o)
            off += sz
        return tuple(outs)


if __name__ == "__main__":
    key = jax.random.PRNGKey(0)
    k_c, k_f, k_s, k_m = jax.random.split(key, 4)

    N, C, H, W = 2, 3, 16, 16
    container = jax.random.normal(k_c, (N, C, H, W), dtype=jnp.float32)
    fake_image = jax.random.normal(k_f, (N, C, H, W), dtype=jnp.float32)
    secret_image = jax.random.normal(k_s, (N, C, H, W), dtype=jnp.float32)
    face_mask = (jax.random.uniform(k_m, (N, 1, H, W)) > 0.5).astype(jnp.float32)

    layer = ResizePallas(resize_ratio_min=0.7, resize_ratio_max=1.3)
    rng = np.random.default_rng(0)
    c_r, f_r, s_r, m_r = layer(rng, container, fake_image, secret_image, face_mask)
    outs = jax.block_until_ready((c_r, f_r, s_r, m_r))

    # Sanity-check the Pallas path against the pure-JAX reference.
    ratio_q = int(round(layer.last_ratio * _RATIO_QUANT))
    for got, src in zip(outs, (container, fake_image, secret_image, face_mask)):
        ref = _reference_resize(src, ratio_q)
        assert got.shape == ref.shape, (got.shape, ref.shape)
        np.testing.assert_allclose(np.asarray(got), np.asarray(ref),
                                   rtol=1e-5, atol=1e-5)

    print("KERNEL_OK")
</pallas_src>

<mosaic_0001>
module attributes {stable_mosaic.version = 11 : i64} {
  func.func @_resize_kernel(%arg0: i32, %arg1: memref<10x16x16xf32, #tpu.memory_space<vmem>>, %arg2: memref<17x16xf32, #tpu.memory_space<vmem>>, %arg3: memref<16x128xf32, #tpu.memory_space<vmem>>, %arg4: memref<10x17x128xf32, #tpu.memory_space<vmem>>) attributes {dimension_semantics = [#tpu.dimension_semantics<parallel>], iteration_bounds = array<i64: 2>, scalar_prefetch = 0 : i64, scratch_operands = 0 : i64, tpu.core_type = #tpu.core_type<tc>, window_params = [{transform_indices = @transform_0, window_bounds = array<i64: 10, 16, 16>}, {pipeline_mode = #tpu.pipeline_mode<synchronous>, transform_indices = @transform_1, window_bounds = array<i64: 17, 16>}, {pipeline_mode = #tpu.pipeline_mode<synchronous>, transform_indices = @transform_2, window_bounds = array<i64: 16, 128>}, {transform_indices = @transform_3, window_bounds = array<i64: 10, 17, 128>}]} {
    %c0 = arith.constant 0 : index
    %c0_0 = arith.constant 0 : index
    %0 = vector.load %arg2[%c0, %c0_0] : memref<17x16xf32, #tpu.memory_space<vmem>>, vector<17x16xf32>
    %c0_1 = arith.constant 0 : index
    %c0_2 = arith.constant 0 : index
    %1 = vector.load %arg3[%c0_1, %c0_2] : memref<16x128xf32, #tpu.memory_space<vmem>>, vector<16x128xf32>
    %c0_3 = arith.constant 0 : index
    %c0_4 = arith.constant 0 : index
    %c0_5 = arith.constant 0 : index
    %2 = vector.load %arg1[%c0_3, %c0_4, %c0_5] : memref<10x16x16xf32, #tpu.memory_space<vmem>>, vector<1x16x16xf32>
    %3 = vector.shape_cast %2 : vector<1x16x16xf32> to vector<16x16xf32>
    %cst = arith.constant dense<0.000000e+00> : vector<16x128xf32>
    %4 = tpu.matmul %3, %1, %cst {dimension_numbers = #tpu.dot_dimension_numbers<[1], [0], [0], [1], [0, 0, 1, 1], [], []>} : vector<16x16xf32>, vector<16x128xf32>, vector<16x128xf32> -> vector<16x128xf32>
    %cst_6 = arith.constant dense<0.000000e+00> : vector<17x128xf32>
    %5 = tpu.matmul %0, %4, %cst_6 {dimension_numbers = #tpu.dot_dimension_numbers<[1], [0], [0], [1], [0, 0, 1, 1], [], []>} : vector<17x16xf32>, vector<16x128xf32>, vector<17x128xf32> -> vector<17x128xf32>
    %c0_7 = arith.constant 0 : index
    %c0_8 = arith.constant 0 : index
    %c0_9 = arith.constant 0 : index
    %6 = vector.load %arg4[%c0_7, %c0_8, %c0_9] : memref<10x17x128xf32, #tpu.memory_space<vmem>>, vector<1x17x128xf32>
    %7 = vector.shape_cast %6 : vector<1x17x128xf32> to vector<17x128xf32>
    %8 = vector.shape_cast %5 : vector<17x128xf32> to vector<1x17x128xf32>
    tpu.vector_store %arg4[%c0_7, %c0_8, %c0_9], %8 {strides = array<i32>} : memref<10x17x128xf32, #tpu.memory_space<vmem>>, vector<1x17x128xf32>,
    %c1 = arith.constant 1 : index
    %c0_10 = arith.constant 0 : index
    %c0_11 = arith.constant 0 : index
    %9 = vector.load %arg1[%c1, %c0_10, %c0_11] : memref<10x16x16xf32, #tpu.memory_space<vmem>>, vector<1x16x16xf32>
    %10 = vector.shape_cast %9 : vector<1x16x16xf32> to vector<16x16xf32>
    %cst_12 = arith.constant dense<0.000000e+00> : vector<16x128xf32>
    %11 = tpu.matmul %10, %1, %cst_12 {dimension_numbers = #tpu.dot_dimension_numbers<[1], [0], [0], [1], [0, 0, 1, 1], [], []>} : vector<16x16xf32>, vector<16x128xf32>, vector<16x128xf32> -> vector<16x128xf32>
    %cst_13 = arith.constant dense<0.000000e+00> : vector<17x128xf32>
    %12 = tpu.matmul %0, %11, %cst_13 {dimension_numbers = #tpu.dot_dimension_numbers<[1], [0], [0], [1], [0, 0, 1, 1], [], []>} : vector<17x16xf32>, vector<16x128xf32>, vector<17x128xf32> -> vector<17x128xf32>
    %c1_14 = arith.constant 1 : index
    %c0_15 = arith.constant 0 : index
    %c0_16 = arith.constant 0 : index
    %13 = vector.load %arg4[%c1_14, %c0_15, %c0_16] : memref<10x17x128xf32, #tpu.memory_space<vmem>>, vector<1x17x128xf32>
    %14 = vector.shape_cast %13 : vector<1x17x128xf32> to vector<17x128xf32>
    %15 = vector.shape_cast %12 : vector<17x128xf32> to vector<1x17x128xf32>
    tpu.vector_store %arg4[%c1_14, %c0_15, %c0_16], %15 {strides = array<i32>} : memref<10x17x128xf32, #tpu.memory_space<vmem>>, vector<1x17x128xf32>,
    %c2 = arith.constant 2 : index
    %c0_17 = arith.constant 0 : index
    %c0_18 = arith.constant 0 : index
    %16 = vector.load %arg1[%c2, %c0_17, %c0_18] : memref<10x16x16xf32, #tpu.memory_space<vmem>>, vector<1x16x16xf32>
    %17 = vector.shape_cast %16 : vector<1x16x16xf32> to vector<16x16xf32>
    %cst_19 = arith.constant dense<0.000000e+00> : vector<16x128xf32>
    %18 = tpu.matmul %17, %1, %cst_19 {dimension_numbers = #tpu.dot_dimension_numbers<[1], [0], [0], [1], [0, 0, 1, 1], [], []>} : vector<16x16xf32>, vector<16x128xf32>, vector<16x128xf32> -> vector<16x128xf32>
    %cst_20 = arith.constant dense<0.000000e+00> : vector<17x128xf32>
    %19 = tpu.matmul %0, %18, %cst_20 {dimension_numbers = #tpu.dot_dimension_numbers<[1], [0], [0], [1], [0, 0, 1, 1], [], []>} : vector<17x16xf32>, vector<16x128xf32>, vector<17x128xf32> -> vector<17x128xf32>
    %c2_21 = arith.constant 2 : index
    %c0_22 = arith.constant 0 : index
    %c0_23 = arith.constant 0 : index
    %20 = vector.load %arg4[%c2_21, %c0_22, %c0_23] : memref<10x17x128xf32, #tpu.memory_space<vmem>>, vector<1x17x128xf32>
    %21 = vector.shape_cast %20 : vector<1x17x128xf32> to vector<17x128xf32>
    %22 = vector.shape_cast %19 : vector<17x128xf32> to vector<1x17x128xf32>
    tpu.vector_store %arg4[%c2_21, %c0_22, %c0_23], %22 {strides = array<i32>} : memref<10x17x128xf32, #tpu.memory_space<vmem>>, vector<1x17x128xf32>,
    %c3 = arith.constant 3 : index
    %c0_24 = arith.constant 0 : index
    %c0_25 = arith.constant 0 : index
    %23 = vector.load %arg1[%c3, %c0_24, %c0_25] : memref<10x16x16xf32, #tpu.memory_space<vmem>>, vector<1x16x16xf32>
    %24 = vector.shape_cast %23 : vector<1x16x16xf32> to vector<16x16xf32>
    %cst_26 = arith.constant dense<0.000000e+00> : vector<16x128xf32>
    %25 = tpu.matmul %24, %1, %cst_26 {dimension_numbers = #tpu.dot_dimension_numbers<[1], [0], [0], [1], [0, 0, 1, 1], [], []>} : vector<16x16xf32>, vector<16x128xf32>, vector<16x128xf32> -> vector<16x128xf32>
    %cst_27 = arith.constant dense<0.000000e+00> : vector<17x128xf32>
    %26 = tpu.matmul %0, %25, %cst_27 {dimension_numbers = #tpu.dot_dimension_numbers<[1], [0], [0], [1], [0, 0, 1, 1], [], []>} : vector<17x16xf32>, vector<16x128xf32>, vector<17x128xf32> -> vector<17x128xf32>
    %c3_28 = arith.constant 3 : index
    %c0_29 = arith.constant 0 : index
    %c0_30 = arith.constant 0 : index
    %27 = vector.load %arg4[%c3_28, %c0_29, %c0_30] : memref<10x17x128xf32, #tpu.memory_space<vmem>>, vector<1x17x128xf32>
    %28 = vector.shape_cast %27 : vector<1x17x128xf32> to vector<17x128xf32>
    %29 = vector.shape_cast %26 : vector<17x128xf32> to vector<1x17x128xf32>
    tpu.vector_store %arg4[%c3_28, %c0_29, %c0_30], %29 {strides = array<i32>} : memref<10x17x128xf32, #tpu.memory_space<vmem>>, vector<1x17x128xf32>,
    %c4 = arith.constant 4 : index
    %c0_31 = arith.constant 0 : index
    %c0_32 = arith.constant 0 : index
    %30 = vector.load %arg1[%c4, %c0_31, %c0_32] : memref<10x16x16xf32, #tpu.memory_space<vmem>>, vector<1x16x16xf32>
    %31 = vector.shape_cast %30 : vector<1x16x16xf32> to vector<16x16xf32>
    %cst_33 = arith.constant dense<0.000000e+00> : vector<16x128xf32>
    %32 = tpu.matmul %31, %1, %cst_33 {dimension_numbers = #tpu.dot_dimension_numbers<[1], [0], [0], [1], [0, 0, 1, 1], [], []>} : vector<16x16xf32>, vector<16x128xf32>, vector<16x128xf32> -> vector<16x128xf32>
    %cst_34 = arith.constant dense<0.000000e+00> : vector<17x128xf32>
    %33 = tpu.matmul %0, %32, %cst_34 {dimension_numbers = #tpu.dot_dimension_numbers<[1], [0], [0], [1], [0, 0, 1, 1], [], []>} : vector<17x16xf32>, vector<16x128xf32>, vector<17x128xf32> -> vector<17x128xf32>
    %c4_35 = arith.constant 4 : index
    %c0_36 = arith.constant 0 : index
    %c0_37 = arith.constant 0 : index
    %34 = vector.load %arg4[%c4_35, %c0_36, %c0_37] : memref<10x17x128xf32, #tpu.memory_space<vmem>>, vector<1x17x128xf32>
    %35 = vector.shape_cast %34 : vector<1x17x128xf32> to vector<17x128xf32>
    %36 = vector.shape_cast %33 : vector<17x128xf32> to vector<1x17x128xf32>
    tpu.vector_store %arg4[%c4_35, %c0_36, %c0_37], %36 {strides = array<i32>} : memref<10x17x128xf32, #tpu.memory_space<vmem>>, vector<1x17x128xf32>,
    %c5 = arith.constant 5 : index
    %c0_38 = arith.constant 0 : index
    %c0_39 = arith.constant 0 : index
    %37 = vector.load %arg1[%c5, %c0_38, %c0_39] : memref<10x16x16xf32, #tpu.memory_space<vmem>>, vector<1x16x16xf32>
    %38 = vector.shape_cast %37 : vector<1x16x16xf32> to vector<16x16xf32>
    %cst_40 = arith.constant dense<0.000000e+00> : vector<16x128xf32>
    %39 = tpu.matmul %38, %1, %cst_40 {dimension_numbers = #tpu.dot_dimension_numbers<[1], [0], [0], [1], [0, 0, 1, 1], [], []>} : vector<16x16xf32>, vector<16x128xf32>, vector<16x128xf32> -> vector<16x128xf32>
    %cst_41 = arith.constant dense<0.000000e+00> : vector<17x128xf32>
    %40 = tpu.matmul %0, %39, %cst_41 {dimension_numbers = #tpu.dot_dimension_numbers<[1], [0], [0], [1], [0, 0, 1, 1], [], []>} : vector<17x16xf32>, vector<16x128xf32>, vector<17x128xf32> -> vector<17x128xf32>
    %c5_42 = arith.constant 5 : index
    %c0_43 = arith.constant 0 : index
    %c0_44 = arith.constant 0 : index
    %41 = vector.load %arg4[%c5_42, %c0_43, %c0_44] : memref<10x17x128xf32, #tpu.memory_space<vmem>>, vector<1x17x128xf32>
    %42 = vector.shape_cast %41 : vector<1x17x128xf32> to vector<17x128xf32>
    %43 = vector.shape_cast %40 : vector<17x128xf32> to vector<1x17x128xf32>
    tpu.vector_store %arg4[%c5_42, %c0_43, %c0_44], %43 {strides = array<i32>} : memref<10x17x128xf32, #tpu.memory_space<vmem>>, vector<1x17x128xf32>,
    %c6 = arith.constant 6 : index
    %c0_45 = arith.constant 0 : index
    %c0_46 = arith.constant 0 : index
    %44 = vector.load %arg1[%c6, %c0_45, %c0_46] : memref<10x16x16xf32, #tpu.memory_space<vmem>>, vector<1x16x16xf32>
    %45 = vector.shape_cast %44 : vector<1x16x16xf32> to vector<16x16xf32>
    %cst_47 = arith.constant dense<0.000000e+00> : vector<16x128xf32>
    %46 = tpu.matmul %45, %1, %cst_47 {dimension_numbers = #tpu.dot_dimension_numbers<[1], [0], [0], [1], [0, 0, 1, 1], [], []>} : vector<16x16xf32>, vector<16x128xf32>, vector<16x128xf32> -> vector<16x128xf32>
    %cst_48 = arith.constant dense<0.000000e+00> : vector<17x128xf32>
    %47 = tpu.matmul %0, %46, %cst_48 {dimension_numbers = #tpu.dot_dimension_numbers<[1], [0], [0], [1], [0, 0, 1, 1], [], []>} : vector<17x16xf32>, vector<16x128xf32>, vector<17x128xf32> -> vector<17x128xf32>
    %c6_49 = arith.constant 6 : index
    %c0_50 = arith.constant 0 : index
    %c0_51 = arith.constant 0 : index
    %48 = vector.load %arg4[%c6_49, %c0_50, %c0_51] : memref<10x17x128xf32, #tpu.memory_space<vmem>>, vector<1x17x128xf32>
    %49 = vector.shape_cast %48 : vector<1x17x128xf32> to vector<17x128xf32>
    %50 = vector.shape_cast %47 : vector<17x128xf32> to vector<1x17x128xf32>
    tpu.vector_store %arg4[%c6_49, %c0_50, %c0_51], %50 {strides = array<i32>} : memref<10x17x128xf32, #tpu.memory_space<vmem>>, vector<1x17x128xf32>,
    %c7 = arith.constant 7 : index
    %c0_52 = arith.constant 0 : index
    %c0_53 = arith.constant 0 : index
    %51 = vector.load %arg1[%c7, %c0_52, %c0_53] : memref<10x16x16xf32, #tpu.memory_space<vmem>>, vector<1x16x16xf32>
    %52 = vector.shape_cast %51 : vector<1x16x16xf32> to vector<16x16xf32>
    %cst_54 = arith.constant dense<0.000000e+00> : vector<16x128xf32>
    %53 = tpu.matmul %52, %1, %cst_54 {dimension_numbers = #tpu.dot_dimension_numbers<[1], [0], [0], [1], [0, 0, 1, 1], [], []>} : vector<16x16xf32>, vector<16x128xf32>, vector<16x128xf32> -> vector<16x128xf32>
    %cst_55 = arith.constant dense<0.000000e+00> : vector<17x128xf32>
    %54 = tpu.matmul %0, %53, %cst_55 {dimension_numbers = #tpu.dot_dimension_numbers<[1], [0], [0], [1], [0, 0, 1, 1], [], []>} : vector<17x16xf32>, vector<16x128xf32>, vector<17x128xf32> -> vector<17x128xf32>
    %c7_56 = arith.constant 7 : index
    %c0_57 = arith.constant 0 : index
    %c0_58 = arith.constant 0 : index
    %55 = vector.load %arg4[%c7_56, %c0_57, %c0_58] : memref<10x17x128xf32, #tpu.memory_space<vmem>>, vector<1x17x128xf32>
    %56 = vector.shape_cast %55 : vector<1x17x128xf32> to vector<17x128xf32>
    %57 = vector.shape_cast %54 : vector<17x128xf32> to vector<1x17x128xf32>
    tpu.vector_store %arg4[%c7_56, %c0_57, %c0_58], %57 {strides = array<i32>} : memref<10x17x128xf32, #tpu.memory_space<vmem>>, vector<1x17x128xf32>,
    %c8 = arith.constant 8 : index
    %c0_59 = arith.constant 0 : index
    %c0_60 = arith.constant 0 : index
    %58 = vector.load %arg1[%c8, %c0_59, %c0_60] : memref<10x16x16xf32, #tpu.memory_space<vmem>>, vector<1x16x16xf32>
    %59 = vector.shape_cast %58 : vector<1x16x16xf32> to vector<16x16xf32>
    %cst_61 = arith.constant dense<0.000000e+00> : vector<16x128xf32>
    %60 = tpu.matmul %59, %1, %cst_61 {dimension_numbers = #tpu.dot_dimension_numbers<[1], [0], [0], [1], [0, 0, 1, 1], [], []>} : vector<16x16xf32>, vector<16x128xf32>, vector<16x128xf32> -> vector<16x128xf32>
    %cst_62 = arith.constant dense<0.000000e+00> : vector<17x128xf32>
    %61 = tpu.matmul %0, %60, %cst_62 {dimension_numbers = #tpu.dot_dimension_numbers<[1], [0], [0], [1], [0, 0, 1, 1], [], []>} : vector<17x16xf32>, vector<16x128xf32>, vector<17x128xf32> -> vector<17x128xf32>
    %c8_63 = arith.constant 8 : index
    %c0_64 = arith.constant 0 : index
    %c0_65 = arith.constant 0 : index
    %62 = vector.load %arg4[%c8_63, %c0_64, %c0_65] : memref<10x17x128xf32, #tpu.memory_space<vmem>>, vector<1x17x128xf32>
    %63 = vector.shape_cast %62 : vector<1x17x128xf32> to vector<17x128xf32>
    %64 = vector.shape_cast %61 : vector<17x128xf32> to vector<1x17x128xf32>
    tpu.vector_store %arg4[%c8_63, %c0_64, %c0_65], %64 {strides = array<i32>} : memref<10x17x128xf32, #tpu.memory_space<vmem>>, vector<1x17x128xf32>,
    %c9 = arith.constant 9 : index
    %c0_66 = arith.constant 0 : index
    %c0_67 = arith.constant 0 : index
    %65 = vector.load %arg1[%c9, %c0_66, %c0_67] : memref<10x16x16xf32, #tpu.memory_space<vmem>>, vector<1x16x16xf32>
    %66 = vector.shape_cast %65 : vector<1x16x16xf32> to vector<16x16xf32>
    %cst_68 = arith.constant dense<0.000000e+00> : vector<16x128xf32>
    %67 = tpu.matmul %66, %1, %cst_68 {dimension_numbers = #tpu.dot_dimension_numbers<[1], [0], [0], [1], [0, 0, 1, 1], [], []>} : vector<16x16xf32>, vector<16x128xf32>, vector<16x128xf32> -> vector<16x128xf32>
    %cst_69 = arith.constant dense<0.000000e+00> : vector<17x128xf32>
    %68 = tpu.matmul %0, %67, %cst_69 {dimension_numbers = #tpu.dot_dimension_numbers<[1], [0], [0], [1], [0, 0, 1, 1], [], []>} : vector<17x16xf32>, vector<16x128xf32>, vector<17x128xf32> -> vector<17x128xf32>
    %c9_70 = arith.constant 9 : index
    %c0_71 = arith.constant 0 : index
    %c0_72 = arith.constant 0 : index
    %69 = vector.load %arg4[%c9_70, %c0_71, %c0_72] : memref<10x17x128xf32, #tpu.memory_space<vmem>>, vector<1x17x128xf32>
    %70 = vector.shape_cast %69 : vector<1x17x128xf32> to vector<17x128xf32>
    %71 = vector.shape_cast %68 : vector<17x128xf32> to vector<1x17x128xf32>
    tpu.vector_store %arg4[%c9_70, %c0_71, %c0_72], %71 {strides = array<i32>} : memref<10x17x128xf32, #tpu.memory_space<vmem>>, vector<1x17x128xf32>,
    return
  }
  func.func @transform_0(%arg0: i32) -> (i32, i32, i32) {
    %c0_i32 = arith.constant 0 : i32
    %c0_i32_0 = arith.constant 0 : i32
    %c0_i32_1 = arith.constant 0 : i32
    return %arg0, %c0_i32, %c0_i32_0 : i32, i32, i32
  }
  func.func @transform_1(%arg0: i32) -> (i32, i32) {
    %c0_i32 = arith.constant 0 : i32
    %c0_i32_0 = arith.constant 0 : i32
    %c0_i32_1 = arith.constant 0 : i32
    return %c0_i32, %c0_i32_0 : i32, i32
  }
  func.func @transform_2(%arg0: i32) -> (i32, i32) {
    %c0_i32 = arith.constant 0 : i32
    %c0_i32_0 = arith.constant 0 : i32
    %c0_i32_1 = arith.constant 0 : i32
    return %c0_i32, %c0_i32_0 : i32, i32
  }
  func.func @transform_3(%arg0: i32) -> (i32, i32, i32) {
    %c0_i32 = arith.constant 0 : i32
    %c0_i32_0 = arith.constant 0 : i32
    %c0_i32_1 = arith.constant 0 : i32
    return %arg0, %c0_i32, %c0_i32_0 : i32, i32, i32
  }
}

</mosaic_0001>

<llo_original>
// kernel: tpu_custom_call.1
$region0: #{tpu_custom_call.1}
  #allocation0 [shape = 'u32[]', space=smem, size = 0x4, offset = 0x4, fixed_abs, tag = 'smem constant byte address 0x4 - core index']
  #allocation1 [shape = 'u32[72,128]{1,0:T(1,128)}', space=vmem, size = 0x9000, scoped, tag = 'internal scratch']
  %s0 = inlined_call_operand.vmem [shape: f32[20,16,16], index: 0, kind: input, shape index: {}]
  %s1 = inlined_call_operand.vmem [shape: f32[17,16], index: 1, kind: input, shape index: {}]
  %s2 = inlined_call_operand.vmem [shape: f32[16,128], index: 2, kind: input, shape index: {}]
  %s3 = inlined_call_operand.vmem [shape: f32[20,17,128], index: 3, kind: output, shape index: {}]
  %s4 = sld [smem:[#allocation0]]
  $region45: #{tpu_custom_call.1} parent=0
    _
  %s6 = ssub.s32 1, %s4
  %s7 = scalar_select 0, %s6, %s4
  loop: start=0, step=1, limit=4
  $region2: #{tpu_custom_call.1} parent=0 // loop_pre_header
    _
  $region3: #{tpu_custom_call.1} parent=0 // loop_header
    %s9 = sphi 0, %s13
    %p10 = scmp.ge.s32.totalorder %s9, 4
    %s19 = sphi 0, %s21
    %s22 = sphi 0, %s19
    %s23 = sphi 0, %s22
    %s39 = sphi 0, %s23
    %s43 = sphi 0, %s43
    %s45 = sphi 0, %s43
    %s46 = sphi 0, %s45
    %s60 = sphi 0, %s46
    %s64 = sphi 0, %s64
    %s66 = sphi 0, %s64
    %s67 = sphi 0, %s66
    %s81 = sphi 0, %s67
    %s87 = sphi 0, %s89
    %s90 = sphi 0, %s87
    %s91 = sphi 0, %s90
    %s107 = sphi 0, %s91
  $region4: #{tpu_custom_call.1} parent=0 // loop_header_branch
    %12 = sbr.rel (%p10) target = $region8
  $region5: #{tpu_custom_call.1} parent=0 // loop_body
    %s14 = ssub.s32 %s9, 1
    %s15 = ssub.s32 %s9, 2
    %s16 = sadd.s32 %s9, 1
    %s17 = ssub.s32 %s9, %s16
    %p18 = scmp.eq.s32.totalorder %s17, 0
    %s20 = sadd.s32 %s19, 1
    %s21 = scalar_select %p18, %s19, %s20
    %p24 = pneg %p18
    %p25 = scmp.eq.s32.totalorder %s9, 1
    %p26 = por %p24, %p25
    %p27 = scmp.ne.s32.totalorder %s19, %s22
    %p28 = scmp.eq.s32.totalorder %s9, 0
    %p29 = por %p27, %p28
    %p30 = scmp.ne.s32.totalorder %s19, %s22
    %p31 = scmp.eq.s32.totalorder %s14, 1
    %p32 = por %p30, %p31
    %p33 = scmp.ne.s32.totalorder %s22, %s23
    %p34 = scmp.eq.s32.totalorder %s14, 0
    %p35 = por %p33, %p34
    %p36 = scmp.ne.s32.totalorder %s22, %s23
    %p37 = scmp.eq.s32.totalorder %s15, 1
    %p38 = por %p36, %p37
    %p40 = scmp.ne.s32.totalorder %s23, %s39
    %p41 = scmp.eq.s32.totalorder %s15, 0
    %p42 = por %p40, %p41
    %s44 = sadd.s32 %s43, 1
    %p47 = scmp.eq.s32.totalorder %s9, 1
    %p48 = scmp.ne.s32.totalorder %s43, %s45
    %p49 = scmp.eq.s32.totalorder %s9, 0
    %p50 = por %p48, %p49
    %p51 = scmp.ne.s32.totalorder %s43, %s45
    %p52 = scmp.eq.s32.totalorder %s14, 1
    %p53 = por %p51, %p52
    %p54 = scmp.ne.s32.totalorder %s45, %s46
    %p55 = scmp.eq.s32.totalorder %s14, 0
    %p56 = por %p54, %p55
    %p57 = scmp.ne.s32.totalorder %s45, %s46
    %p58 = scmp.eq.s32.totalorder %s15, 1
    %p59 = por %p57, %p58
    %p61 = scmp.ne.s32.totalorder %s46, %s60
    %p62 = scmp.eq.s32.totalorder %s15, 0
    %p63 = por %p61, %p62
    %s65 = sadd.s32 %s64, 1
    %p68 = scmp.eq.s32.totalorder %s9, 1
    %p69 = scmp.ne.s32.totalorder %s64, %s66
    %p70 = scmp.eq.s32.totalorder %s9, 0
    %p71 = por %p69, %p70
    %p72 = scmp.ne.s32.totalorder %s64, %s66
    %p73 = scmp.eq.s32.totalorder %s14, 1
    %p74 = por %p72, %p73
    %p75 = scmp.ne.s32.totalorder %s66, %s67
    %p76 = scmp.eq.s32.totalorder %s14, 0
    %p77 = por %p75, %p76
    %p78 = scmp.ne.s32.totalorder %s66, %s67
    %p79 = scmp.eq.s32.totalorder %s15, 1
    %p80 = por %p78, %p79
    %p82 = scmp.ne.s32.totalorder %s67, %s81
    %p83 = scmp.eq.s32.totalorder %s15, 0
    %p84 = por %p82, %p83
    %s85 = ssub.s32 %s9, %s16
    %p86 = scmp.eq.s32.totalorder %s85, 0
    %s88 = sadd.s32 %s87, 1
    %s89 = scalar_select %p86, %s87, %s88
    %p92 = pneg %p86
    %p93 = scmp.eq.s32.totalorder %s9, 1
    %p94 = por %p92, %p93
    %p95 = scmp.ne.s32.totalorder %s87, %s90
    %p96 = scmp.eq.s32.totalorder %s9, 0
    %p97 = por %p95, %p96
    %p98 = scmp.ne.s32.totalorder %s87, %s90
    %p99 = scmp.eq.s32.totalorder %s14, 1
    %p100 = por %p98, %p99
    %p101 = scmp.ne.s32.totalorder %s90, %s91
    %p102 = scmp.eq.s32.totalorder %s14, 0
    %p103 = por %p101, %p102
    %p104 = scmp.ne.s32.totalorder %s90, %s91
    %p105 = scmp.eq.s32.totalorder %s15, 1
    %p106 = por %p104, %p105
    %p108 = scmp.ne.s32.totalorder %s91, %s107
    %p109 = scmp.eq.s32.totalorder %s15, 0
    %p110 = por %p108, %p109
    %p111 = scmp.le.s32.totalorder 1, %s9
    %p112 = scmp.lt.s32.totalorder %s9, 3
    %p113 = pnand %p111, %p112
    %p114 = pneg %p113
    // Predicated region
    $region9: #{tpu_custom_call.1} parent=5 // pred_check
      _
    $region10: #{tpu_custom_call.1} parent=5 // pred_check_branch
      %116 = sbr.rel (%p113) target = $region12
    $region11: #{tpu_custom_call.1} parent=5 // pred_region
      %s117 = ssub.s32 %s9, 1
      // Predicated region
      $region13: #{tpu_custom_call.1} parent=11 // pred_check
        %p118 = pneg %p56
      $region14: #{tpu_custom_call.1} parent=11 // pred_check_branch
        %120 = sbr.rel (%p118) target = $region16
      $region15: #{tpu_custom_call.1} parent=11 // pred_region
        _
      $region16: #{tpu_custom_call.1} parent=11 // pred_fallthru
        _
      // Predicated region
      $region17: #{tpu_custom_call.1} parent=11 // pred_check
        %p121 = pneg %p77
      $region18: #{tpu_custom_call.1} parent=11 // pred_check_branch
        %123 = sbr.rel (%p121) target = $region20
      $region19: #{tpu_custom_call.1} parent=11 // pred_region
        _
      $region20: #{tpu_custom_call.1} parent=11 // pred_fallthru
        _
    $region12: #{tpu_custom_call.1} parent=5 // pred_fallthru
      _
    %p124 = scmp.lt.s32.totalorder %s9, 2
    // Predicated region
    $region21: #{tpu_custom_call.1} parent=5 // pred_check
      %p125 = pneg %p124
    $region22: #{tpu_custom_call.1} parent=5 // pred_check_branch
      %127 = sbr.rel (%p125) target = $region24
    $region23: #{tpu_custom_call.1} parent=5 // pred_region
      // Predicated region
      $region25: #{tpu_custom_call.1} parent=23 // pred_check
        %p128 = pneg %p29
      $region26: #{tpu_custom_call.1} parent=23 // pred_check_branch
        %130 = sbr.rel (%p128) target = $region28
      $region27: #{tpu_custom_call.1} parent=23 // pred_region
        %s131 = smul.u32 10, %s9
        %p132 = scmp.lt.s32.totalorder %s131, 19
        %s133 = scalar_select %p132, %s131, 19
        %s134 = smul.addr %s133, 2
        %s135 = smul.addr %s134, 8
        %s136 = scalar_lea.vmem %s0, %s135
        %s137 = smul.u32 10, %s9
      $region28: #{tpu_custom_call.1} parent=23 // pred_fallthru
        _
    $region24: #{tpu_custom_call.1} parent=5 // pred_fallthru
      _
    %p138 = scmp.le.s32.totalorder 1, %s9
    %p139 = scmp.lt.s32.totalorder %s9, 3
    %p140 = pnand %p138, %p139
    %p141 = pneg %p140
    // Predicated region
    $region29: #{tpu_custom_call.1} parent=5 // pred_check
      _
    $region30: #{tpu_custom_call.1} parent=5 // pred_check_branch
      %143 = sbr.rel (%p140) target = $region32
    $region31: #{tpu_custom_call.1} parent=5 // pred_region
      %s144 = ssub.s32 %s9, 1
      %s145 = smul.u32 10, %s14
      %p146 = scmp.lt.s32.totalorder %s145, 19
      %s147 = scalar_select %p146, %s145, 19
      %s148 = smul.addr %s147, 2
      %s149 = smul.addr %s148, 8
      %s150 = scalar_lea.vmem %s0, %s149
      %p151 = pneg %p35
      %p152 = pneg %p32
      %p153 = pneg %p56
      %p154 = pneg %p53
      %p155 = pneg %p77
      %p156 = pneg %p74
      %p157 = pneg %p103
      %p158 = pneg %p100
      %s159 = smul.u32 10, %s14
      %p160 = scmp.lt.s32.totalorder %s159, 19
      %s161 = scalar_select %p160, %s159, 19
      %s162 = smul.addr %s161, 3
      %s163 = smul.addr %s162, 8
      %s164 = scalar_lea.vmem %s3, %s163
      %s165 = smul.u32 10, %s14
      %p166 = scmp.lt.s32.totalorder %s165, 19
      %s167 = scalar_select %p166, %s165, 19
      %s168 = smul.addr %s167, 2
      %s169 = smul.addr %s168, 8
      %s170 = scalar_lea.vmem %s0, %s169
      %s171 = smul.u32 10, %s14
      %s172 = smul.u32 10, %s14
      %p173 = scmp.lt.s32.totalorder %s172, 19
      %s174 = scalar_select %p173, %s172, 19
      %s175 = smul.addr %s174, 3
      %s176 = smul.addr %s175, 8
      %s177 = scalar_lea.vmem %s3, %s176
      %s178 = smul.u32 10, %s14
      %v179 = vld [vmem:[%s1] sm:$0xff]
      %v180 = vld [vmem:[%s1 + $0x8] sm:$0xff]
      %v181 = vld [vmem:[%s1 + $0x10] sm:$0x1]
      %v182 = vld [vmem:[%s2] sm:$0xff]
      %v183 = vld [vmem:[%s2 + $0x8] sm:$0xff]
      %v184 = vld [vmem:[%s170] sm:$0xff]
      %v185 = vld [vmem:[%s170 + $0x8] sm:$0xff]
      %vm186 = vcmask 130048
      %v188 = vsel %vm186, %v184, 0
      %v191 = vsel %vm186, %v185, 0
      %193 = vmatpush.msra.mxu0 0.0
      %194 = vmatpush.msra.mxu0 0.0
      %195 = vmatpush.msra.mxu0 0.0
      %196 = vmatpush.msra.mxu0 0.0
      %197 = vmatpush.msra.mxu0 0.0
      %198 = vmatpush.msra.mxu0 0.0
      %199 = vmatpush.msra.mxu0 0.0
      %200 = vmatpush.msra.mxu0 0.0
      %201 = vmatpush.msra.mxu0 0.0
      %202 = vmatpush.msra.mxu0 0.0
      %203 = vmatpush.msra.mxu0 0.0
      %204 = vmatpush.msra.mxu0 0.0
      %205 = vmatpush.msra.mxu0 0.0
      %206 = vmatpush.msra.mxu0 0.0
      %207 = vmatpush.msra.mxu0 %v183
      %208 = vmatpush.msra.mxu0 %v182
      %209 = vmatmul.f32.gmra.mxu0 %v188
      %v210 = vpop.f32.mrf.mxu0
      %v211 = vadd.f32 0.0, %v210
      %212 = vmatmul.f32.gmra.mxu0 %v191
      %v213 = vpop.f32.mrf.mxu0
      %v214 = vadd.f32 0.0, %v213
      %215 = vdwg.mxu0
      %v217 = vsel %vm186, %v179, 0
      %v220 = vsel %vm186, %v180, 0
      %v223 = vsel %vm186, %v181, 0
      %225 = vmatpush.msra.mxu0 0.0
      %226 = vmatpush.msra.mxu0 0.0
      %227 = vmatpush.msra.mxu0 0.0
      %228 = vmatpush.msra.mxu0 0.0
      %229 = vmatpush.msra.mxu0 0.0
      %230 = vmatpush.msra.mxu0 0.0
      %231 = vmatpush.msra.mxu0 0.0
      %232 = vmatpush.msra.mxu0 0.0
      %233 = vmatpush.msra.mxu0 0.0
      %234 = vmatpush.msra.mxu0 0.0
      %235 = vmatpush.msra.mxu0 0.0
      %236 = vmatpush.msra.mxu0 0.0
      %237 = vmatpush.msra.mxu0 0.0
      %238 = vmatpush.msra.mxu0 0.0
      %239 = vmatpush.msra.mxu0 %v214
      %240 = vmatpush.msra.mxu0 %v211
      %241 = vmatmul.f32.gmra.mxu0 %v217
      %v242 = vpop.f32.mrf.mxu0
      %v243 = vadd.f32 0.0, %v242
      %244 = vmatmul.f32.gmra.mxu0 %v220
      %v245 = vpop.f32.mrf.mxu0
      %v246 = vadd.f32 0.0, %v245
      %247 = vmatmul.f32.gmra.mxu0 %v223
      %v248 = vpop.f32.mrf.mxu0
      %v249 = vadd.f32 0.0, %v248
      %250 = vdwg.mxu0
      %251 = vst [vmem:[%s177] sm:$0xff] %v243
      %252 = vst [vmem:[%s177 + $0x8] sm:$0xff] %v246
      %253 = vst [vmem:[%s177 + $0x10] sm:$0x1] %v249
      %s254 = scalar_lea.vmem %s170, 16
      %v255 = vld [vmem:[%s254] sm:$0xff]
      %v256 = vld [vmem:[%s254 + $0x8] sm:$0xff]
      %v258 = vsel %vm186, %v255, 0
      %v261 = vsel %vm186, %v256, 0
      %263 = vmatpush.msra.mxu0 0.0
      %264 = vmatpush.msra.mxu0 0.0
      %265 = vmatpush.msra.mxu0 0.0
      %266 = vmatpush.msra.mxu0 0.0
      %267 = vmatpush.msra.mxu0 0.0
      %268 = vmatpush.msra.mxu0 0.0
      %269 = vmatpush.msra.mxu0 0.0
      %270 = vmatpush.msra.mxu0 0.0
      %271 = vmatpush.msra.mxu0 0.0
      %272 = vmatpush.msra.mxu0 0.0
      %273 = vmatpush.msra.mxu0 0.0
      %274 = vmatpush.msra.mxu0 0.0
      %275 = vmatpush.msra.mxu0 0.0
      %276 = vmatpush.msra.mxu0 0.0
      %277 = vmatpush.msra.mxu0 %v183
      %278 = vmatpush.msra.mxu0 %v182
      %279 = vmatmul.f32.gmra.mxu0 %v258
      %v280 = vpop.f32.mrf.mxu0
      %v281 = vadd.f32 0.0, %v280
      %282 = vmatmul.f32.gmra.mxu0 %v261
      %v283 = vpop.f32.mrf.mxu0
      %v284 = vadd.f32 0.0, %v283
      %285 = vdwg.mxu0
      %286 = vmatpush.msra.mxu0 0.0
      %287 = vmatpush.msra.mxu0 0.0
      %288 = vmatpush.msra.mxu0 0.0
      %289 = vmatpush.msra.mxu0 0.0
      %290 = vmatpush.msra.mxu0 0.0
      %291 = vmatpush.msra.mxu0 0.0
      %292 = vmatpush.msra.mxu0 0.0
      %293 = vmatpush.msra.mxu0 0.0
      %294 = vmatpush.msra.mxu0 0.0
      %295 = vmatpush.msra.mxu0 0.0
      %296 = vmatpush.msra.mxu0 0.0
      %297 = vmatpush.msra.mxu0 0.0
      %298 = vmatpush.msra.mxu0 0.0
      %299 = vmatpush.msra.mxu0 0.0
      %300 = vmatpush.msra.mxu0 %v284
      %301 = vmatpush.msra.mxu0 %v281
      %302 = vmatmul.f32.gmra.mxu0 %v217
      %v303 = vpop.f32.mrf.mxu0
      %v304 = vadd.f32 0.0, %v303
      %305 = vmatmul.f32.gmra.mxu0 %v220
      %v306 = vpop.f32.mrf.mxu0
      %v307 = vadd.f32 0.0, %v306
      %308 = vmatmul.f32.gmra.mxu0 %v223
      %v309 = vpop.f32.mrf.mxu0
      %v310 = vadd.f32 0.0, %v309
      %311 = vdwg.mxu0
      %s312 = scalar_lea.vmem %s177, 24
      %313 = vst [vmem:[%s312] sm:$0xff] %v304
      %314 = vst [vmem:[%s312 + $0x8] sm:$0xff] %v307
      %315 = vst [vmem:[%s312 + $0x10] sm:$0x1] %v310
      %s316 = scalar_lea.vmem %s170, 32
      %v317 = vld [vmem:[%s316] sm:$0xff]
      %v318 = vld [vmem:[%s316 + $0x8] sm:$0xff]
      %v320 = vsel %vm186, %v317, 0
      %v323 = vsel %vm186, %v318, 0
      %325 = vmatpush.msra.mxu0 0.0
      %326 = vmatpush.msra.mxu0 0.0
      %327 = vmatpush.msra.mxu0 0.0
      %328 = vmatpush.msra.mxu0 0.0
      %329 = vmatpush.msra.mxu0 0.0
      %330 = vmatpush.msra.mxu0 0.0
      %331 = vmatpush.msra.mxu0 0.0
      %332 = vmatpush.msra.mxu0 0.0
      %333 = vmatpush.msra.mxu0 0.0
      %334 = vmatpush.msra.mxu0 0.0
      %335 = vmatpush.msra.mxu0 0.0
      %336 = vmatpush.msra.mxu0 0.0
      %337 = vmatpush.msra.mxu0 0.0
      %338 = vmatpush.msra.mxu0 0.0
      %339 = vmatpush.msra.mxu0 %v183
      %340 = vmatpush.msra.mxu0 %v182
      %341 = vmatmul.f32.gmra.mxu0 %v320
      %v342 = vpop.f32.mrf.mxu0
      %v343 = vadd.f32 0.0, %v342
      %344 = vmatmul.f32.gmra.mxu0 %v323
      %v345 = vpop.f32.mrf.mxu0
      %v346 = vadd.f32 0.0, %v345
      %347 = vdwg.mxu0
      %348 = vmatpush.msra.mxu0 0.0
      %349 = vmatpush.msra.mxu0 0.0
      %350 = vmatpush.msra.mxu0 0.0
      %351 = vmatpush.msra.mxu0 0.0
      %352 = vmatpush.msra.mxu0 0.0
      %353 = vmatpush.msra.mxu0 0.0
      %354 = vmatpush.msra.mxu0 0.0
      %355 = vmatpush.msra.mxu0 0.0
      %356 = vmatpush.msra.mxu0 0.0
      %357 = vmatpush.msra.mxu0 0.0
      %358 = vmatpush.msra.mxu0 0.0
      %359 = vmatpush.msra.mxu0 0.0
      %360 = vmatpush.msra.mxu0 0.0
      %361 = vmatpush.msra.mxu0 0.0
      %362 = vmatpush.msra.mxu0 %v346
      %363 = vmatpush.msra.mxu0 %v343
      %364 = vmatmul.f32.gmra.mxu0 %v217
      %v365 = vpop.f32.mrf.mxu0
      %v366 = vadd.f32 0.0, %v365
      %367 = vmatmul.f32.gmra.mxu0 %v220
      %v368 = vpop.f32.mrf.mxu0
      %v369 = vadd.f32 0.0, %v368
      %370 = vmatmul.f32.gmra.mxu0 %v223
      %v371 = vpop.f32.mrf.mxu0
      %v372 = vadd.f32 0.0, %v371
      %373 = vdwg.mxu0
      %s374 = scalar_lea.vmem %s177, 48
      %375 = vst [vmem:[%s374] sm:$0xff] %v366
      %376 = vst [vmem:[%s374 + $0x8] sm:$0xff] %v369
      %377 = vst [vmem:[%s374 + $0x10] sm:$0x1] %v372
      %s378 = scalar_lea.vmem %s170, 48
      %v379 = vld [vmem:[%s378] sm:$0xff]
      %v380 = vld [vmem:[%s378 + $0x8] sm:$0xff]
      %v382 = vsel %vm186, %v379, 0
      %v385 = vsel %vm186, %v380, 0
      %387 = vmatpush.msra.mxu0 0.0
      %388 = vmatpush.msra.mxu0 0.0
      %389 = vmatpush.msra.mxu0 0.0
      %390 = vmatpush.msra.mxu0 0.0
      %391 = vmatpush.msra.mxu0 0.0
      %392 = vmatpush.msra.mxu0 0.0
      %393 = vmatpush.msra.mxu0 0.0
      %394 = vmatpush.msra.mxu0 0.0
      %395 = vmatpush.msra.mxu0 0.0
      %396 = vmatpush.msra.mxu0 0.0
      %397 = vmatpush.msra.mxu0 0.0
      %398 = vmatpush.msra.mxu0 0.0
      %399 = vmatpush.msra.mxu0 0.0
      %400 = vmatpush.msra.mxu0 0.0
      %401 = vmatpush.msra.mxu0 %v183
      %402 = vmatpush.msra.mxu0 %v182
      %403 = vmatmul.f32.gmra.mxu0 %v382
      %v404 = vpop.f32.mrf.mxu0
      %v405 = vadd.f32 0.0, %v404
      %406 = vmatmul.f32.gmra.mxu0 %v385
      %v407 = vpop.f32.mrf.mxu0
      %v408 = vadd.f32 0.0, %v407
      %409 = vdwg.mxu0
      %410 = vmatpush.msra.mxu0 0.0
      %411 = vmatpush.msra.mxu0 0.0
      %412 = vmatpush.msra.mxu0 0.0
      %413 = vmatpush.msra.mxu0 0.0
      %414 = vmatpush.msra.mxu0 0.0
      %415 = vmatpush.msra.mxu0 0.0
      %416 = vmatpush.msra.mxu0 0.0
      %417 = vmatpush.msra.mxu0 0.0
      %418 = vmatpush.msra.mxu0 0.0
      %419 = vmatpush.msra.mxu0 0.0
      %420 = vmatpush.msra.mxu0 0.0
      %421 = vmatpush.msra.mxu0 0.0
      %422 = vmatpush.msra.mxu0 0.0
      %423 = vmatpush.msra.mxu0 0.0
      %424 = vmatpush.msra.mxu0 %v408
      %425 = vmatpush.msra.mxu0 %v405
      %426 = vmatmul.f32.gmra.mxu0 %v217
      %v427 = vpop.f32.mrf.mxu0
      %v428 = vadd.f32 0.0, %v427
      %429 = vmatmul.f32.gmra.mxu0 %v220
      %v430 = vpop.f32.mrf.mxu0
      %v431 = vadd.f32 0.0, %v430
      %432 = vmatmul.f32.gmra.mxu0 %v223
      %v433 = vpop.f32.mrf.mxu0
      %v434 = vadd.f32 0.0, %v433
      %435 = vdwg.mxu0
      %s436 = scalar_lea.vmem %s177, 72
      %437 = vst [vmem:[%s436] sm:$0xff] %v428
      %438 = vst [vmem:[%s436 + $0x8] sm:$0xff] %v431
      %439 = vst [vmem:[%s436 + $0x10] sm:$0x1] %v434
      %s440 = scalar_lea.vmem %s170, 64
      %v441 = vld [vmem:[%s440] sm:$0xff]
      %v442 = vld [vmem:[%s440 + $0x8] sm:$0xff]
      %v444 = vsel %vm186, %v441, 0
      %v447 = vsel %vm186, %v442, 0
      %449 = vmatpush.msra.mxu0 0.0
      %450 = vmatpush.msra.mxu0 0.0
      %451 = vmatpush.msra.mxu0 0.0
      %452 = vmatpush.msra.mxu0 0.0
      %453 = vmatpush.msra.mxu0 0.0
      %454 = vmatpush.msra.mxu0 0.0
      %455 = vmatpush.msra.mxu0 0.0
      %456 = vmatpush.msra.mxu0 0.0
      %457 = vmatpush.msra.mxu0 0.0
      %458 = vmatpush.msra.mxu0 0.0
      %459 = vmatpush.msra.mxu0 0.0
      %460 = vmatpush.msra.mxu0 0.0
      %461 = vmatpush.msra.mxu0 0.0
      %462 = vmatpush.msra.mxu0 0.0
      %463 = vmatpush.msra.mxu0 %v183
      %464 = vmatpush.msra.mxu0 %v182
      %465 = vmatmul.f32.gmra.mxu0 %v444
      %v466 = vpop.f32.mrf.mxu0
      %v467 = vadd.f32 0.0, %v466
      %468 = vmatmul.f32.gmra.mxu0 %v447
      %v469 = vpop.f32.mrf.mxu0
      %v470 = vadd.f32 0.0, %v469
      %471 = vdwg.mxu0
      %472 = vmatpush.msra.mxu0 0.0
      %473 = vmatpush.msra.mxu0 0.0
      %474 = vmatpush.msra.mxu0 0.0
      %475 = vmatpush.msra.mxu0 0.0
      %476 = vmatpush.msra.mxu0 0.0
      %477 = vmatpush.msra.mxu0 0.0
      %478 = vmatpush.msra.mxu0 0.0
      %479 = vmatpush.msra.mxu0 0.0
      %480 = vmatpush.msra.mxu0 0.0
      %481 = vmatpush.msra.mxu0 0.0
      %482 = vmatpush.msra.mxu0 0.0
      %483 = vmatpush.msra.mxu0 0.0
      %484 = vmatpush.msra.mxu0 0.0
      %485 = vmatpush.msra.mxu0 0.0
      %486 = vmatpush.msra.mxu0 %v470
      %487 = vmatpush.msra.mxu0 %v467
      %488 = vmatmul.f32.gmra.mxu0 %v217
      %v489 = vpop.f32.mrf.mxu0
      %v490 = vadd.f32 0.0, %v489
      %491 = vmatmul.f32.gmra.mxu0 %v220
      %v492 = vpop.f32.mrf.mxu0
      %v493 = vadd.f32 0.0, %v492
      %494 = vmatmul.f32.gmra.mxu0 %v223
      %v495 = vpop.f32.mrf.mxu0
      %v496 = vadd.f32 0.0, %v495
      %497 = vdwg.mxu0
      %s498 = scalar_lea.vmem %s177, 96
      %499 = vst [vmem:[%s498] sm:$0xff] %v490
      %500 = vst [vmem:[%s498 + $0x8] sm:$0xff] %v493
      %501 = vst [vmem:[%s498 + $0x10] sm:$0x1] %v496
      %s502 = scalar_lea.vmem %s170, 80
      %v503 = vld [vmem:[%s502] sm:$0xff]
      %v504 = vld [vmem:[%s502 + $0x8] sm:$0xff]
      %v506 = vsel %vm186, %v503, 0
      %v509 = vsel %vm186, %v504, 0
      %511 = vmatpush.msra.mxu0 0.0
      %512 = vmatpush.msra.mxu0 0.0
      %513 = vmatpush.msra.mxu0 0.0
      %514 = vmatpush.msra.mxu0 0.0
      %515 = vmatpush.msra.mxu0 0.0
      %516 = vmatpush.msra.mxu0 0.0
      %517 = vmatpush.msra.mxu0 0.0
      %518 = vmatpush.msra.mxu0 0.0
      %519 = vmatpush.msra.mxu0 0.0
      %520 = vmatpush.msra.mxu0 0.0
      %521 = vmatpush.msra.mxu0 0.0
      %522 = vmatpush.msra.mxu0 0.0
      %523 = vmatpush.msra.mxu0 0.0
      %524 = vmatpush.msra.mxu0 0.0
      %525 = vmatpush.msra.mxu0 %v183
      %526 = vmatpush.msra.mxu0 %v182
      %527 = vmatmul.f32.gmra.mxu0 %v506
      %v528 = vpop.f32.mrf.mxu0
      %v529 = vadd.f32 0.0, %v528
      %530 = vmatmul.f32.gmra.mxu0 %v509
      %v531 = vpop.f32.mrf.mxu0
      %v532 = vadd.f32 0.0, %v531
      %533 = vdwg.mxu0
      %534 = vmatpush.msra.mxu0 0.0
      %535 = vmatpush.msra.mxu0 0.0
      %536 = vmatpush.msra.mxu0 0.0
      %537 = vmatpush.msra.mxu0 0.0
      %538 = vmatpush.msra.mxu0 0.0
      %539 = vmatpush.msra.mxu0 0.0
      %540 = vmatpush.msra.mxu0 0.0
      %541 = vmatpush.msra.mxu0 0.0
      %542 = vmatpush.msra.mxu0 0.0
      %543 = vmatpush.msra.mxu0 0.0
      %544 = vmatpush.msra.mxu0 0.0
      %545 = vmatpush.msra.mxu0 0.0
      %546 = vmatpush.msra.mxu0 0.0
      %547 = vmatpush.msra.mxu0 0.0
      %548 = vmatpush.msra.mxu0 %v532
      %549 = vmatpush.msra.mxu0 %v529
      %550 = vmatmul.f32.gmra.mxu0 %v217
      %v551 = vpop.f32.mrf.mxu0
      %v552 = vadd.f32 0.0, %v551
      %553 = vmatmul.f32.gmra.mxu0 %v220
      %v554 = vpop.f32.mrf.mxu0
      %v555 = vadd.f32 0.0, %v554
      %556 = vmatmul.f32.gmra.mxu0 %v223
      %v557 = vpop.f32.mrf.mxu0
      %v558 = vadd.f32 0.0, %v557
      %559 = vdwg.mxu0
      %s560 = scalar_lea.vmem %s177, 120
      %561 = vst [vmem:[%s560] sm:$0xff] %v552
      %562 = vst [vmem:[%s560 + $0x8] sm:$0xff] %v555
      %563 = vst [vmem:[%s560 + $0x10] sm:$0x1] %v558
      %s564 = scalar_lea.vmem %s170, 96
      %v565 = vld [vmem:[%s564] sm:$0xff]
      %v566 = vld [vmem:[%s564 + $0x8] sm:$0xff]
      %v568 = vsel %vm186, %v565, 0
      %v571 = vsel %vm186, %v566, 0
      %573 = vmatpush.msra.mxu0 0.0
      %574 = vmatpush.msra.mxu0 0.0
      %575 = vmatpush.msra.mxu0 0.0
      %576 = vmatpush.msra.mxu0 0.0
      %577 = vmatpush.msra.mxu0 0.0
      %578 = vmatpush.msra.mxu0 0.0
      %579 = vmatpush.msra.mxu0 0.0
      %580 = vmatpush.msra.mxu0 0.0
      %581 = vmatpush.msra.mxu0 0.0
      %582 = vmatpush.msra.mxu0 0.0
      %583 = vmatpush.msra.mxu0 0.0
      %584 = vmatpush.msra.mxu0 0.0
      %585 = vmatpush.msra.mxu0 0.0
      %586 = vmatpush.msra.mxu0 0.0
      %587 = vmatpush.msra.mxu0 %v183
      %588 = vmatpush.msra.mxu0 %v182
      %589 = vmatmul.f32.gmra.mxu0 %v568
      %v590 = vpop.f32.mrf.mxu0
      %v591 = vadd.f32 0.0, %v590
      %592 = vmatmul.f32.gmra.mxu0 %v571
      %v593 = vpop.f32.mrf.mxu0
      %v594 = vadd.f32 0.0, %v593
      %595 = vdwg.mxu0
      %596 = vmatpush.msra.mxu0 0.0
      %597 = vmatpush.msra.mxu0 0.0
      %598 = vmatpush.msra.mxu0 0.0
      %599 = vmatpush.msra.mxu0 0.0
      %600 = vmatpush.msra.mxu0 0.0
      %601 = vmatpush.msra.mxu0 0.0
      %602 = vmatpush.msra.mxu0 0.0
      %603 = vmatpush.msra.mxu0 0.0
      %604 = vmatpush.msra.mxu0 0.0
      %605 = vmatpush.msra.mxu0 0.0
      %606 = vmatpush.msra.mxu0 0.0
      %607 = vmatpush.msra.mxu0 0.0
      %608 = vmatpush.msra.mxu0 0.0
      %609 = vmatpush.msra.mxu0 0.0
      %610 = vmatpush.msra.mxu0 %v594
      %611 = vmatpush.msra.mxu0 %v591
      %612 = vmatmul.f32.gmra.mxu0 %v217
      %v613 = vpop.f32.mrf.mxu0
      %v614 = vadd.f32 0.0, %v613
      %615 = vmatmul.f32.gmra.mxu0 %v220
      %v616 = vpop.f32.mrf.mxu0
      %v617 = vadd.f32 0.0, %v616
      %618 = vmatmul.f32.gmra.mxu0 %v223
      %v619 = vpop.f32.mrf.mxu0
      %v620 = vadd.f32 0.0, %v619
      %621 = vdwg.mxu0
      %s622 = scalar_lea.vmem %s177, 144
      %623 = vst [vmem:[%s622] sm:$0xff] %v614
      %624 = vst [vmem:[%s622 + $0x8] sm:$0xff] %v617
      %625 = vst [vmem:[%s622 + $0x10] sm:$0x1] %v620
      %s626 = scalar_lea.vmem %s170, 112
      %v627 = vld [vmem:[%s626] sm:$0xff]
      %v628 = vld [vmem:[%s626 + $0x8] sm:$0xff]
      %v630 = vsel %vm186, %v627, 0
      %v633 = vsel %vm186, %v628, 0
      %635 = vmatpush.msra.mxu0 0.0
      %636 = vmatpush.msra.mxu0 0.0
      %637 = vmatpush.msra.mxu0 0.0
      %638 = vmatpush.msra.mxu0 0.0
      %639 = vmatpush.msra.mxu0 0.0
      %640 = vmatpush.msra.mxu0 0.0
      %641 = vmatpush.msra.mxu0 0.0
      %642 = vmatpush.msra.mxu0 0.0
      %643 = vmatpush.msra.mxu0 0.0
      %644 = vmatpush.msra.mxu0 0.0
      %645 = vmatpush.msra.mxu0 0.0
      %646 = vmatpush.msra.mxu0 0.0
      %647 = vmatpush.msra.mxu0 0.0
      %648 = vmatpush.msra.mxu0 0.0
      %649 = vmatpush.msra.mxu0 %v183
      %650 = vmatpush.msra.mxu0 %v182
      %651 = vmatmul.f32.gmra.mxu0 %v630
      %v652 = vpop.f32.mrf.mxu0
      %v653 = vadd.f32 0.0, %v652
      %654 = vmatmul.f32.gmra.mxu0 %v633
      %v655 = vpop.f32.mrf.mxu0
      %v656 = vadd.f32 0.0, %v655
      %657 = vdwg.mxu0
      %658 = vmatpush.msra.mxu0 0.0
      %659 = vmatpush.msra.mxu0 0.0
      %660 = vmatpush.msra.mxu0 0.0
      %661 = vmatpush.msra.mxu0 0.0
      %662 = vmatpush.msra.mxu0 0.0
      %663 = vmatpush.msra.mxu0 0.0
      %664 = vmatpush.msra.mxu0 0.0
      %665 = vmatpush.msra.mxu0 0.0
      %666 = vmatpush.msra.mxu0 0.0
      %667 = vmatpush.msra.mxu0 0.0
      %668 = vmatpush.msra.mxu0 0.0
      %669 = vmatpush.msra.mxu0 0.0
      %670 = vmatpush.msra.mxu0 0.0
      %671 = vmatpush.msra.mxu0 0.0
      %672 = vmatpush.msra.mxu0 %v656
      %673 = vmatpush.msra.mxu0 %v653
      %674 = vmatmul.f32.gmra.mxu0 %v217
      %v675 = vpop.f32.mrf.mxu0
      %v676 = vadd.f32 0.0, %v675
      %677 = vmatmul.f32.gmra.mxu0 %v220
      %v678 = vpop.f32.mrf.mxu0
      %v679 = vadd.f32 0.0, %v678
      %680 = vmatmul.f32.gmra.mxu0 %v223
      %v681 = vpop.f32.mrf.mxu0
      %v682 = vadd.f32 0.0, %v681
      %683 = vdwg.mxu0
      %s684 = scalar_lea.vmem %s177, 168
      %685 = vst [vmem:[%s684] sm:$0xff] %v676
      %686 = vst [vmem:[%s684 + $0x8] sm:$0xff] %v679
      %687 = vst [vmem:[%s684 + $0x10] sm:$0x1] %v682
      %s688 = scalar_lea.vmem %s170, 128
      %v689 = vld [vmem:[%s688] sm:$0xff]
      %v690 = vld [vmem:[%s688 + $0x8] sm:$0xff]
      %v692 = vsel %vm186, %v689, 0
      %v695 = vsel %vm186, %v690, 0
      %697 = vmatpush.msra.mxu0 0.0
      %698 = vmatpush.msra.mxu0 0.0
      %699 = vmatpush.msra.mxu0 0.0
      %700 = vmatpush.msra.mxu0 0.0
      %701 = vmatpush.msra.mxu0 0.0
      %702 = vmatpush.msra.mxu0 0.0
      %703 = vmatpush.msra.mxu0 0.0
      %704 = vmatpush.msra.mxu0 0.0
      %705 = vmatpush.msra.mxu0 0.0
      %706 = vmatpush.msra.mxu0 0.0
      %707 = vmatpush.msra.mxu0 0.0
      %708 = vmatpush.msra.mxu0 0.0
      %709 = vmatpush.msra.mxu0 0.0
      %710 = vmatpush.msra.mxu0 0.0
      %711 = vmatpush.msra.mxu0 %v183
      %712 = vmatpush.msra.mxu0 %v182
      %713 = vmatmul.f32.gmra.mxu0 %v692
      %v714 = vpop.f32.mrf.mxu0
      %v715 = vadd.f32 0.0, %v714
      %716 = vmatmul.f32.gmra.mxu0 %v695
      %v717 = vpop.f32.mrf.mxu0
      %v718 = vadd.f32 0.0, %v717
      %719 = vdwg.mxu0
      %720 = vmatpush.msra.mxu0 0.0
      %721 = vmatpush.msra.mxu0 0.0
      %722 = vmatpush.msra.mxu0 0.0
      %723 = vmatpush.msra.mxu0 0.0
      %724 = vmatpush.msra.mxu0 0.0
      %725 = vmatpush.msra.mxu0 0.0
      %726 = vmatpush.msra.mxu0 0.0
      %727 = vmatpush.msra.mxu0 0.0
      %728 = vmatpush.msra.mxu0 0.0
      %729 = vmatpush.msra.mxu0 0.0
      %730 = vmatpush.msra.mxu0 0.0
      %731 = vmatpush.msra.mxu0 0.0
      %732 = vmatpush.msra.mxu0 0.0
      %733 = vmatpush.msra.mxu0 0.0
      %734 = vmatpush.msra.mxu0 %v718
      %735 = vmatpush.msra.mxu0 %v715
      %736 = vmatmul.f32.gmra.mxu0 %v217
      %v737 = vpop.f32.mrf.mxu0
      %v738 = vadd.f32 0.0, %v737
      %739 = vmatmul.f32.gmra.mxu0 %v220
      %v740 = vpop.f32.mrf.mxu0
      %v741 = vadd.f32 0.0, %v740
      %742 = vmatmul.f32.gmra.mxu0 %v223
      %v743 = vpop.f32.mrf.mxu0
      %v744 = vadd.f32 0.0, %v743
      %745 = vdwg.mxu0
      %s746 = scalar_lea.vmem %s177, 192
      %747 = vst [vmem:[%s746] sm:$0xff] %v738
      %748 = vst [vmem:[%s746 + $0x8] sm:$0xff] %v741
      %749 = vst [vmem:[%s746 + $0x10] sm:$0x1] %v744
      %s750 = scalar_lea.vmem %s170, 144
      %v751 = vld [vmem:[%s750] sm:$0xff]
      %v752 = vld [vmem:[%s750 + $0x8] sm:$0xff]
      %v754 = vsel %vm186, %v751, 0
      %v757 = vsel %vm186, %v752, 0
      %759 = vmatpush.msra.mxu0 0.0
      %760 = vmatpush.msra.mxu0 0.0
      %761 = vmatpush.msra.mxu0 0.0
      %762 = vmatpush.msra.mxu0 0.0
      %763 = vmatpush.msra.mxu0 0.0
      %764 = vmatpush.msra.mxu0 0.0
      %765 = vmatpush.msra.mxu0 0.0
      %766 = vmatpush.msra.mxu0 0.0
      %767 = vmatpush.msra.mxu0 0.0
      %768 = vmatpush.msra.mxu0 0.0
      %769 = vmatpush.msra.mxu0 0.0
      %770 = vmatpush.msra.mxu0 0.0
      %771 = vmatpush.msra.mxu0 0.0
      %772 = vmatpush.msra.mxu0 0.0
      %773 = vmatpush.msra.mxu0 %v183
      %774 = vmatpush.msra.mxu0 %v182
      %775 = vmatmul.f32.gmra.mxu0 %v754
      %v776 = vpop.f32.mrf.mxu0
      %v777 = vadd.f32 0.0, %v776
      %778 = vmatmul.f32.gmra.mxu0 %v757
      %v779 = vpop.f32.mrf.mxu0
      %v780 = vadd.f32 0.0, %v779
      %781 = vdwg.mxu0
      %782 = vmatpush.msra.mxu0 0.0
      %783 = vmatpush.msra.mxu0 0.0
      %784 = vmatpush.msra.mxu0 0.0
      %785 = vmatpush.msra.mxu0 0.0
      %786 = vmatpush.msra.mxu0 0.0
      %787 = vmatpush.msra.mxu0 0.0
      %788 = vmatpush.msra.mxu0 0.0
      %789 = vmatpush.msra.mxu0 0.0
      %790 = vmatpush.msra.mxu0 0.0
      %791 = vmatpush.msra.mxu0 0.0
      %792 = vmatpush.msra.mxu0 0.0
      %793 = vmatpush.msra.mxu0 0.0
      %794 = vmatpush.msra.mxu0 0.0
      %795 = vmatpush.msra.mxu0 0.0
      %796 = vmatpush.msra.mxu0 %v780
      %797 = vmatpush.msra.mxu0 %v777
      %798 = vmatmul.f32.gmra.mxu0 %v217
      %v799 = vpop.f32.mrf.mxu0
      %v800 = vadd.f32 0.0, %v799
      %801 = vmatmul.f32.gmra.mxu0 %v220
      %v802 = vpop.f32.mrf.mxu0
      %v803 = vadd.f32 0.0, %v802
      %804 = vmatmul.f32.gmra.mxu0 %v223
      %v805 = vpop.f32.mrf.mxu0
      %v806 = vadd.f32 0.0, %v805
      %807 = vdwg.mxu0
      %s808 = scalar_lea.vmem %s177, 216
      %809 = vst [vmem:[%s808] sm:$0xff] %v800
      %810 = vst [vmem:[%s808 + $0x8] sm:$0xff] %v803
      %811 = vst [vmem:[%s808 + $0x10] sm:$0x1] %v806
      %s812 = smul.u32 10, %s14
      %p813 = scmp.lt.s32.totalorder %s812, 19
      %s814 = scalar_select %p813, %s812, 19
      %s815 = smul.addr %s814, 3
      %s816 = smul.addr %s815, 8
      %s817 = scalar_lea.vmem %s3, %s816
      // Predicated region
      $region33: #{tpu_custom_call.1} parent=31 // pred_check
        %p818 = pneg %p100
      $region34: #{tpu_custom_call.1} parent=31 // pred_check_branch
        %820 = sbr.rel (%p818) target = $region36
      $region35: #{tpu_custom_call.1} parent=31 // pred_region
        %s821 = smul.u32 10, %s14
      $region36: #{tpu_custom_call.1} parent=31 // pred_fallthru
        _
    $region32: #{tpu_custom_call.1} parent=5 // pred_fallthru
      _
    %p822 = scmp.le.s32.totalorder 2, %s9
    // Predicated region
    $region37: #{tpu_custom_call.1} parent=5 // pred_check
      %p823 = pneg %p822
    $region38: #{tpu_custom_call.1} parent=5 // pred_check_branch
      %825 = sbr.rel (%p823) target = $region40
    $region39: #{tpu_custom_call.1} parent=5 // pred_region
      %s826 = ssub.s32 %s9, 2
      // Predicated region
      $region41: #{tpu_custom_call.1} parent=39 // pred_check
        %p827 = pneg %p106
      $region42: #{tpu_custom_call.1} parent=39 // pred_check_branch
        %829 = sbr.rel (%p827) target = $region44
      $region43: #{tpu_custom_call.1} parent=39 // pred_region
        %s830 = smul.u32 10, %s15
        %p831 = scmp.lt.s32.totalorder %s830, 19
        %s832 = scalar_select %p831, %s830, 19
        %s833 = smul.addr %s832, 3
        %s834 = smul.addr %s833, 8
        %s835 = scalar_lea.vmem %s3, %s834
      $region44: #{tpu_custom_call.1} parent=39 // pred_fallthru
        _
    $region40: #{tpu_custom_call.1} parent=5 // pred_fallthru
      _
  $region6: #{tpu_custom_call.1} parent=0 // loop_footer
    %s13 = sadd.s32 1, %s9
  $region7: #{tpu_custom_call.1} parent=0 // loop_footer_branch
    %8 = sbr.rel target = $region3
  $region8: #{tpu_custom_call.1} parent=0 // loop_exit
    _

</llo_original>
